<compile_context>
chip_gen: v7x
topology: tpu7x:2x2x1
jax: 0.10.0
libtpu: 0.0.40
codegen_flags: <defaults>
</compile_context>

<pallas_src>
import functools

import jax
import jax.numpy as jnp
from jax.experimental import pallas as pl
from jax.experimental.pallas import tpu as pltpu


def _round_up(n, m):
    return ((n + m - 1) // m) * m


def _predictor_kernel(x_ref, wa_ref, ba_ref, w2_ref, b2_ref, wf_ref, bf_ref,
                      out_ref, *, h1_width):
    # Any dtype cast of x happens here, in VMEM (cheap VPU work hidden under
    # the DMA), never as a separate HBM pass in the wrapper.
    x = x_ref[...].astype(wa_ref.dtype)                                # (TB, 256)

    # Fused first layer of BOTH heads: one MXU pass over the (dominant) x tile.
    # wa is (256, 256): price head lanes [0,128), vol head lanes [128,192),
    # zero columns [192,256) -> ReLU keeps them exactly 0.
    y = jnp.dot(x, wa_ref[...], preferred_element_type=jnp.float32) + ba_ref[...]
    y = jnp.maximum(y, 0.0)
    h1 = y[:, :h1_width]                                               # (TB, 128) price hidden-1
    v1 = y[:, h1_width:]                                               # (TB, 128) vol hidden (zero-padded)

    # Dropout(0.1) is identity at inference time.
    # w2 is zero-padded to (128, 128) so h2 is a full 128-lane tile.
    h2 = jnp.dot(h1.astype(w2_ref.dtype), w2_ref[...],
                 preferred_element_type=jnp.float32) + b2_ref[...]
    h2 = jnp.maximum(h2, 0.0)                                          # (TB, 128)

    # Final (hidden -> 1) projections as VPU multiply + cross-lane reduction;
    # an N=1 MXU matmul would waste the whole systolic array. Zero-padded
    # weight lanes contribute nothing to the sums.
    price = jnp.sum(h2 * wf_ref[0:1, :], axis=-1, keepdims=True) + bf_ref[0:1, :]
    v2 = jnp.sum(v1 * wf_ref[1:2, :], axis=-1, keepdims=True) + bf_ref[1:2, :]

    # Softplus (PyTorch default beta=1, threshold=20); the clamp inside exp
    # also keeps garbage rows of a partial last block finite.
    vol = jnp.where(v2 > 20.0, v2, jnp.log1p(jnp.exp(jnp.minimum(v2, 20.0))))

    # Single unmasked store of the combined (TB, 2) block:
    # col 0 = price_change, col 1 = volatility.
    out_ref[...] = jnp.concatenate([price, vol], axis=-1).astype(out_ref.dtype)


def prepare_fused_params(params, compute_dtype=None):
    """One-time weight fusion (hoisted out of the per-call path).

    compute_dtype: dtype for the two matmul weights (e.g. jnp.bfloat16);
    biases and final-projection weights stay float32; accumulation is float32.
    """
    w1, b1 = params["w1"], params["b1"]        # (in, H1), (1, H1)
    w2, b2 = params["w2"], params["b2"]        # (H1, H2), (1, H2)
    w3, b3 = params["w3"], params["b3"]        # (H2, 1), (1, 1)
    vw1, vb1 = params["vw1"], params["vb1"]    # (in, H2), (1, H2)
    vw2, vb2 = params["vw2"], params["vb2"]    # (H2, 1), (1, 1)

    in_size, H1 = w1.shape
    H2 = w2.shape[1]
    pad_v = H1 - H2                            # pad the vol/H2 lane blocks up to H1
    cd = jnp.float32 if compute_dtype is None else compute_dtype

    wa = jnp.concatenate(
        [w1, jnp.pad(vw1, ((0, 0), (0, pad_v)))], axis=1).astype(cd)          # (in, 2*H1)
    ba = jnp.concatenate(
        [b1, jnp.pad(vb1, ((0, 0), (0, pad_v)))], axis=1).astype(jnp.float32)  # (1, 2*H1)
    w2c = jnp.pad(w2, ((0, 0), (0, pad_v))).astype(cd)                        # (H1, H1)
    b2c = jnp.pad(b2, ((0, 0), (0, pad_v))).astype(jnp.float32)               # (1, H1)
    wf = jnp.concatenate(
        [jnp.pad(w3.T, ((0, 0), (0, pad_v))),
         jnp.pad(vw2.T, ((0, 0), (0, pad_v)))], axis=0).astype(jnp.float32)   # (2, H1)
    bf = jnp.concatenate([b3, vb2], axis=0).astype(jnp.float32)               # (2, 1)

    return dict(wa=wa, ba=ba, w2=w2c, b2=b2c, wf=wf, bf=bf,
                h1_width=H1, input_size=in_size)


def _choose_batch_tile(B, requested):
    if requested is not None:
        bt = requested
    elif B >= 4096:
        bt = 2048            # big streaming tiles; ~86% of HBM roofline per docs
    else:
        # Aim for >= 2 grid steps so v7x's two TensorCores and the DMA
        # prefetch/writeback pipeline are both engaged.
        bt = max(8, _round_up(pl.cdiv(B, 2), 8))
    bt = min(bt, _round_up(B, 8))
    return max(8, _round_up(bt, 8))


def price_target_predictor(x, fused, *, batch_tile=None, x_buffers=2):
    """Fused forward pass.

    x: (B, input_size) array already living in HBM in the dtype you want the
       dominant stream read at (pass bf16 for the halved-bandwidth path).
    fused: output of prepare_fused_params.
    Returns (price_change, volatility), each (B, 1) float32.
    """
    B, input_size = x.shape
    assert input_size == fused["input_size"]
    H1 = fused["h1_width"]

    batch_tile = _choose_batch_tile(B, batch_tile)
    grid = (pl.cdiv(B, batch_tile),)           # partial last block; no jnp.pad copy

    if x_buffers is not None and x_buffers > 2:
        # Optional deeper buffering for small tiles with exposed DMA latency.
        x_spec = pl.BlockSpec((batch_tile, input_size), lambda i: (i, 0),
                              pipeline_mode=pl.Buffered(x_buffers))
    else:
        x_spec = pl.BlockSpec((batch_tile, input_size), lambda i: (i, 0))

    def full_spec(a):
        # Small parameter, resident in VMEM for every grid step.
        return pl.BlockSpec(a.shape, lambda i: (0, 0))

    out = pl.pallas_call(
        functools.partial(_predictor_kernel, h1_width=H1),
        out_shape=jax.ShapeDtypeStruct((B, 2), jnp.float32),
        grid_spec=pltpu.PrefetchScalarGridSpec(
            num_scalar_prefetch=0,
            grid=grid,
            in_specs=[
                x_spec,
                full_spec(fused["wa"]), full_spec(fused["ba"]),
                full_spec(fused["w2"]), full_spec(fused["b2"]),
                full_spec(fused["wf"]), full_spec(fused["bf"]),
            ],
            out_specs=pl.BlockSpec((batch_tile, 2), lambda i: (i, 0)),
        ),
        compiler_params=pltpu.CompilerParams(
            dimension_semantics=("parallel",),
            vmem_limit_bytes=32 * 1024 * 1024),
    )(x, fused["wa"], fused["ba"], fused["w2"], fused["b2"],
      fused["wf"], fused["bf"])

    return out[:, 0:1], out[:, 1:2]


def init_params(key, input_size=256, hidden_size=128, dtype=jnp.float32):
    """Deterministic synthetic parameters matching the PyTorch module's shapes.

    Weights stored as (in_features, out_features); biases as (1, out_features).
    """
    h2 = hidden_size // 2
    keys = jax.random.split(key, 10)

    def lin(kw, kb, fan_in, fan_out):
        bound = 1.0 / jnp.sqrt(fan_in)
        w = jax.random.uniform(kw, (fan_in, fan_out), dtype, -bound, bound)
        b = jax.random.uniform(kb, (1, fan_out), dtype, -bound, bound)
        return w, b

    w1, b1 = lin(keys[0], keys[1], input_size, hidden_size)   # price Linear(256,128)
    w2, b2 = lin(keys[2], keys[3], hidden_size, h2)           # price Linear(128,64)
    w3, b3 = lin(keys[4], keys[5], h2, 1)                     # price Linear(64,1)
    vw1, vb1 = lin(keys[6], keys[7], input_size, h2)          # vol Linear(256,64)
    vw2, vb2 = lin(keys[8], keys[9], h2, 1)                   # vol Linear(64,1)

    return dict(w1=w1, b1=b1, w2=w2, b2=b2, w3=w3, b3=b3,
                vw1=vw1, vb1=vb1, vw2=vw2, vb2=vb2)


def _reference(x, p, compute_dtype=None):
    """Pure-JAX reference of the PyTorch forward (eval mode), mirroring the
    kernel's optional low-precision matmul casts so the comparison is fair."""
    cd = jnp.float32 if compute_dtype is None else compute_dtype
    xc = x.astype(cd)
    h = jnp.dot(xc, p["w1"].astype(cd), preferred_element_type=jnp.float32) + p["b1"]
    h = jnp.maximum(h, 0.0)
    h = jnp.dot(h.astype(cd), p["w2"].astype(cd),
                preferred_element_type=jnp.float32) + p["b2"]
    h = jnp.maximum(h, 0.0)
    price = jnp.sum(h * p["w3"].T, axis=-1, keepdims=True) + p["b3"]
    v = jnp.dot(xc, p["vw1"].astype(cd), preferred_element_type=jnp.float32) + p["vb1"]
    v = jnp.maximum(v, 0.0)
    v = jnp.sum(v * p["vw2"].T, axis=-1, keepdims=True) + p["vb2"]
    vol = jax.nn.softplus(v)
    return price, vol


if __name__ == "__main__":
    key = jax.random.PRNGKey(0)
    k_param, k_x = jax.random.split(key)

    input_size, hidden_size = 256, 128
    params = init_params(k_param, input_size, hidden_size)

    # Weight fusion done ONCE (hoisted out of the per-call path).
    fused_f32 = prepare_fused_params(params)

    # f32 path: ragged batch (20 rows) -> 2 grid steps (tile 16), partial last
    # block, no wrapper-side padding copy.
    B = 20
    x = jax.random.normal(k_x, (B, input_size), jnp.float32)
    price, vol = price_target_predictor(x, fused_f32)
    jax.block_until_ready((price, vol))

    price_ref, vol_ref = _reference(x, params)
    assert price.shape == (B, 1) and vol.shape == (B, 1)
    assert jnp.allclose(price, price_ref, atol=1e-4, rtol=1e-4)
    assert jnp.allclose(vol, vol_ref, atol=1e-4, rtol=1e-4)
    assert bool(jnp.all(vol > 0.0))   # Softplus output is strictly positive

    # bf16 fast path: x already lives in HBM as bf16 (no wrapper cast pass);
    # matmul weights fused to bf16 once, f32 accumulation. Loose tolerance.
    fused_bf16 = prepare_fused_params(params, compute_dtype=jnp.bfloat16)
    xb = x.astype(jnp.bfloat16)
    p_bf, v_bf = price_target_predictor(xb, fused_bf16, batch_tile=8)
    jax.block_until_ready((p_bf, v_bf))

    p_bf_ref, v_bf_ref = _reference(x, params, compute_dtype=jnp.bfloat16)
    assert p_bf.shape == (B, 1) and v_bf.shape == (B, 1)
    assert jnp.allclose(p_bf, p_bf_ref, atol=3e-2, rtol=3e-2)
    assert jnp.allclose(v_bf, v_bf_ref, atol=3e-2, rtol=3e-2)
    assert bool(jnp.all(v_bf > 0.0))

    print("KERNEL_OK")
</pallas_src>

<mosaic_0001>
module attributes {stable_mosaic.version = 11 : i64} {
  func.func @_predictor_kernel(%arg0: i32, %arg1: memref<16x256xf32, #tpu.memory_space<vmem>>, %arg2: memref<256x256xf32, #tpu.memory_space<vmem>>, %arg3: memref<1x256xf32, #tpu.memory_space<vmem>>, %arg4: memref<128x128xf32, #tpu.memory_space<vmem>>, %arg5: memref<1x128xf32, #tpu.memory_space<vmem>>, %arg6: memref<2x128xf32, #tpu.memory_space<vmem>>, %arg7: memref<2x1xf32, #tpu.memory_space<vmem>>, %arg8: memref<16x2xf32, #tpu.memory_space<vmem>>) attributes {dimension_semantics = [#tpu.dimension_semantics<parallel>], iteration_bounds = array<i64: 2>, scalar_prefetch = 0 : i64, scratch_operands = 0 : i64, tpu.core_type = #tpu.core_type<tc>, window_params = [{transform_indices = @transform_0, window_bounds = array<i64: 16, 256>}, {pipeline_mode = #tpu.pipeline_mode<synchronous>, transform_indices = @transform_1, window_bounds = array<i64: 256, 256>}, {pipeline_mode = #tpu.pipeline_mode<synchronous>, transform_indices = @transform_2, window_bounds = array<i64: 1, 256>}, {pipeline_mode = #tpu.pipeline_mode<synchronous>, transform_indices = @transform_3, window_bounds = array<i64: 128, 128>}, {pipeline_mode = #tpu.pipeline_mode<synchronous>, transform_indices = @transform_4, window_bounds = array<i64: 1, 128>}, {pipeline_mode = #tpu.pipeline_mode<synchronous>, transform_indices = @transform_5, window_bounds = array<i64: 2, 128>}, {pipeline_mode = #tpu.pipeline_mode<synchronous>, transform_indices = @transform_6, window_bounds = array<i64: 2, 1>}, {transform_indices = @transform_7, window_bounds = array<i64: 16, 2>}]} {
    %c0 = arith.constant 0 : index
    %c0_0 = arith.constant 0 : index
    %0 = vector.load %arg1[%c0, %c0_0] : memref<16x256xf32, #tpu.memory_space<vmem>>, vector<16x256xf32>
    %c0_1 = arith.constant 0 : index
    %c0_2 = arith.constant 0 : index
    %1 = vector.load %arg2[%c0_1, %c0_2] : memref<256x256xf32, #tpu.memory_space<vmem>>, vector<256x256xf32>
    %cst = arith.constant dense<0.000000e+00> : vector<16x256xf32>
    %2 = tpu.matmul %0, %1, %cst {dimension_numbers = #tpu.dot_dimension_numbers<[1], [0], [0], [1], [0, 0, 1, 1], [], []>} : vector<16x256xf32>, vector<256x256xf32>, vector<16x256xf32> -> vector<16x256xf32>
    %c0_3 = arith.constant 0 : index
    %c0_4 = arith.constant 0 : index
    %3 = vector.load %arg3[%c0_3, %c0_4] : memref<1x256xf32, #tpu.memory_space<vmem>>, vector<1x256xf32>
    %4 = vector.broadcast %3 : vector<1x256xf32> to vector<16x256xf32>
    %5 = arith.addf %2, %4 : vector<16x256xf32>
    %cst_5 = arith.constant 0.000000e+00 : f32
    %6 = vector.broadcast %cst_5 : f32 to vector<16x256xf32>
    %7 = arith.maximumf %5, %6 : vector<16x256xf32>
    %8 = vector.extract_strided_slice %7 {offsets = [0, 0], sizes = [16, 128], strides = [1, 1]} : vector<16x256xf32> to vector<16x128xf32>
    %9 = vector.extract_strided_slice %7 {offsets = [0, 128], sizes = [16, 128], strides = [1, 1]} : vector<16x256xf32> to vector<16x128xf32>
    %c0_6 = arith.constant 0 : index
    %c0_7 = arith.constant 0 : index
    %10 = vector.load %arg4[%c0_6, %c0_7] : memref<128x128xf32, #tpu.memory_space<vmem>>, vector<128x128xf32>
    %cst_8 = arith.constant dense<0.000000e+00> : vector<16x128xf32>
    %11 = tpu.matmul %8, %10, %cst_8 {dimension_numbers = #tpu.dot_dimension_numbers<[1], [0], [0], [1], [0, 0, 1, 1], [], []>} : vector<16x128xf32>, vector<128x128xf32>, vector<16x128xf32> -> vector<16x128xf32>
    %c0_9 = arith.constant 0 : index
    %c0_10 = arith.constant 0 : index
    %12 = vector.load %arg5[%c0_9, %c0_10] : memref<1x128xf32, #tpu.memory_space<vmem>>, vector<1x128xf32>
    %13 = vector.broadcast %12 : vector<1x128xf32> to vector<16x128xf32>
    %14 = arith.addf %11, %13 : vector<16x128xf32>
    %cst_11 = arith.constant 0.000000e+00 : f32
    %15 = vector.broadcast %cst_11 : f32 to vector<16x128xf32>
    %16 = arith.maximumf %14, %15 : vector<16x128xf32>
    %c0_12 = arith.constant 0 : index
    %c0_13 = arith.constant 0 : index
    %17 = vector.load %arg6[%c0_12, %c0_13] : memref<2x128xf32, #tpu.memory_space<vmem>>, vector<1x128xf32>
    %18 = vector.broadcast %17 : vector<1x128xf32> to vector<16x128xf32>
    %19 = arith.mulf %16, %18 : vector<16x128xf32>
    %cst_14 = arith.constant dense<0.000000e+00> : vector<16xf32>
    %20 = vector.multi_reduction <add>, %19, %cst_14 [1] : vector<16x128xf32> to vector<16xf32>
    %21 = vector.shape_cast %20 : vector<16xf32> to vector<16x1xf32>
    %c0_15 = arith.constant 0 : index
    %c0_16 = arith.constant 0 : index
    %22 = vector.load %arg7[%c0_15, %c0_16] : memref<2x1xf32, #tpu.memory_space<vmem>>, vector<1x1xf32>
    %23 = vector.broadcast %22 : vector<1x1xf32> to vector<16x1xf32>
    %24 = arith.addf %21, %23 : vector<16x1xf32>
    %c1 = arith.constant 1 : index
    %c0_17 = arith.constant 0 : index
    %25 = vector.load %arg6[%c1, %c0_17] : memref<2x128xf32, #tpu.memory_space<vmem>>, vector<1x128xf32>
    %26 = vector.broadcast %25 : vector<1x128xf32> to vector<16x128xf32>
    %27 = arith.mulf %9, %26 : vector<16x128xf32>
    %cst_18 = arith.constant dense<0.000000e+00> : vector<16xf32>
    %28 = vector.multi_reduction <add>, %27, %cst_18 [1] : vector<16x128xf32> to vector<16xf32>
    %29 = vector.shape_cast %28 : vector<16xf32> to vector<16x1xf32>
    %c1_19 = arith.constant 1 : index
    %c0_20 = arith.constant 0 : index
    %30 = vector.load %arg7[%c1_19, %c0_20] : memref<2x1xf32, #tpu.memory_space<vmem>>, vector<1x1xf32>
    %31 = vector.broadcast %30 : vector<1x1xf32> to vector<16x1xf32>
    %32 = arith.addf %29, %31 : vector<16x1xf32>
    %cst_21 = arith.constant 2.000000e+01 : f32
    %33 = vector.broadcast %cst_21 : f32 to vector<16x1xf32>
    %34 = arith.cmpf ogt, %32, %33 : vector<16x1xf32>
    %cst_22 = arith.constant 2.000000e+01 : f32
    %35 = vector.broadcast %cst_22 : f32 to vector<16x1xf32>
    %36 = arith.minimumf %32, %35 : vector<16x1xf32>
    %37 = math.exp %36 : vector<16x1xf32>
    %38 = math.log1p %37 : vector<16x1xf32>
    %39 = arith.select %34, %32, %38 : vector<16x1xi1>, vector<16x1xf32>
    %40 = tpu.concatenate %24, %39 in 1 : vector<16x1xf32>, vector<16x1xf32> -> vector<16x2xf32>
    %c0_23 = arith.constant 0 : index
    %c0_24 = arith.constant 0 : index
    %41 = vector.load %arg8[%c0_23, %c0_24] : memref<16x2xf32, #tpu.memory_space<vmem>>, vector<16x2xf32>
    tpu.vector_store %arg8[%c0_23, %c0_24], %40 {strides = array<i32>} : memref<16x2xf32, #tpu.memory_space<vmem>>, vector<16x2xf32>,
    return
  }
  func.func @transform_0(%arg0: i32) -> (i32, i32) {
    %c0_i32 = arith.constant 0 : i32
    %c0_i32_0 = arith.constant 0 : i32
    return %arg0, %c0_i32 : i32, i32
  }
  func.func @transform_1(%arg0: i32) -> (i32, i32) {
    %c0_i32 = arith.constant 0 : i32
    %c0_i32_0 = arith.constant 0 : i32
    %c0_i32_1 = arith.constant 0 : i32
    return %c0_i32, %c0_i32_0 : i32, i32
  }
  func.func @transform_2(%arg0: i32) -> (i32, i32) {
    %c0_i32 = arith.constant 0 : i32
    %c0_i32_0 = arith.constant 0 : i32
    %c0_i32_1 = arith.constant 0 : i32
    return %c0_i32, %c0_i32_0 : i32, i32
  }
  func.func @transform_3(%arg0: i32) -> (i32, i32) {
    %c0_i32 = arith.constant 0 : i32
    %c0_i32_0 = arith.constant 0 : i32
    %c0_i32_1 = arith.constant 0 : i32
    return %c0_i32, %c0_i32_0 : i32, i32
  }
  func.func @transform_4(%arg0: i32) -> (i32, i32) {
    %c0_i32 = arith.constant 0 : i32
    %c0_i32_0 = arith.constant 0 : i32
    %c0_i32_1 = arith.constant 0 : i32
    return %c0_i32, %c0_i32_0 : i32, i32
  }
  func.func @transform_5(%arg0: i32) -> (i32, i32) {
    %c0_i32 = arith.constant 0 : i32
    %c0_i32_0 = arith.constant 0 : i32
    %c0_i32_1 = arith.constant 0 : i32
    return %c0_i32, %c0_i32_0 : i32, i32
  }
  func.func @transform_6(%arg0: i32) -> (i32, i32) {
    %c0_i32 = arith.constant 0 : i32
    %c0_i32_0 = arith.constant 0 : i32
    %c0_i32_1 = arith.constant 0 : i32
    return %c0_i32, %c0_i32_0 : i32, i32
  }
  func.func @transform_7(%arg0: i32) -> (i32, i32) {
    %c0_i32 = arith.constant 0 : i32
    %c0_i32_0 = arith.constant 0 : i32
    return %arg0, %c0_i32 : i32, i32
  }
}

</mosaic_0001>

<llo_original>
// kernel: tpu_custom_call.1
$region0: #{tpu_custom_call.1}
  #allocation0 [shape = 'u32[]', space=smem, size = 0x4, offset = 0x4, fixed_abs, tag = 'smem constant byte address 0x4 - core index']
  #allocation1 [shape = 'u32[144,128]{1,0:T(1,128)}', space=vmem, size = 0x12000, scoped, tag = 'internal scratch']
  %s0 = inlined_call_operand.hbm [shape: f32[20,256], index: 0, kind: input, shape index: {}]
  %s1 = inlined_call_operand.hbm [shape: f32[256,256], index: 1, kind: input, shape index: {}]
  %s2 = inlined_call_operand.vmem [shape: f32[1,256], index: 2, kind: input, shape index: {}]
  %s3 = inlined_call_operand.hbm [shape: f32[128,128], index: 3, kind: input, shape index: {}]
  %s4 = inlined_call_operand.vmem [shape: f32[1,128], index: 4, kind: input, shape index: {}]
  %s5 = inlined_call_operand.vmem [shape: f32[2,128], index: 5, kind: input, shape index: {}]
  %s6 = inlined_call_operand.vmem [shape: f32[2,1], index: 6, kind: input, shape index: {}]
  %s7 = inlined_call_operand.vmem [shape: f32[20,2], index: 7, kind: output, shape index: {}]
  %s8 = sld [smem:[#allocation0]]
  $region121: #{tpu_custom_call.1} parent=0
    _
  %s10 = ssub.s32 1, %s8
  %s11 = scalar_select 0, %s10, %s8
  $region1: #{tpu_custom_call.1} parent=0
    #allocation2 [shape = 'u8[32768]{0}', space=vmem, size = 0x8000, scoped, tag = 'input window, operand 0']
    #allocation3 [shape = 's32[2]{0}', space=sflag, size = 0x8, scoped, tag = 'scoped memory for tpu_custom_call.1']
    #allocation4 [shape = 'u8[262144]{0}', space=vmem, size = 0x40000, scoped, tag = 'input window, operand 1, single buffered']
    #allocation5 [shape = 's32[1]{0}', space=sflag, size = 0x4, scoped, tag = 'scoped memory for tpu_custom_call.1']
    #allocation6 [shape = 'u8[65536]{0}', space=vmem, size = 0x10000, scoped, tag = 'input window, operand 3, single buffered']
    #allocation7 [shape = 'u8[16384]{0}', space=vmem, size = 0x4000, scoped, tag = 'output window, operand 0']
    %12 = vsyncpa [#allocation3], 0
    %s13 = scalar_lea.sflag [#allocation3], 1
    %14 = vsyncpa %s13, 0
    %15 = vsyncpa [#allocation5], 0
    loop: start=0, step=1, limit=4
    $region2: #{tpu_custom_call.1} parent=1 // loop_pre_header
      _
    $region3: #{tpu_custom_call.1} parent=1 // loop_header
      %s17 = sphi 0, %s21
      %p18 = scmp.ge.s32.totalorder %s17, 4
      %s27 = sphi 0, %s29
      %s30 = sphi 0, %s27
      %s31 = sphi 0, %s30
      %s47 = sphi 0, %s31
      %s51 = sphi 0, %s51
      %s53 = sphi 0, %s51
      %s54 = sphi 0, %s53
      %s68 = sphi 0, %s54
      %s72 = sphi 0, %s72
      %s74 = sphi 0, %s72
      %s75 = sphi 0, %s74
      %s89 = sphi 0, %s75
      %s93 = sphi 0, %s93
      %s95 = sphi 0, %s93
      %s96 = sphi 0, %s95
      %s110 = sphi 0, %s96
      %s114 = sphi 0, %s114
      %s116 = sphi 0, %s114
      %s117 = sphi 0, %s116
      %s131 = sphi 0, %s117
      %s135 = sphi 0, %s135
      %s137 = sphi 0, %s135
      %s138 = sphi 0, %s137
      %s152 = sphi 0, %s138
      %s156 = sphi 0, %s156
      %s158 = sphi 0, %s156
      %s159 = sphi 0, %s158
      %s173 = sphi 0, %s159
      %s179 = sphi 0, %s181
      %s182 = sphi 0, %s179
      %s183 = sphi 0, %s182
      %s199 = sphi 0, %s183
    $region4: #{tpu_custom_call.1} parent=1 // loop_header_branch
      %20 = sbr.rel (%p18) target = $region8
    $region5: #{tpu_custom_call.1} parent=1 // loop_body
      %s22 = ssub.s32 %s17, 1
      %s23 = ssub.s32 %s17, 2
      %s24 = sadd.s32 %s17, 1
      %s25 = ssub.s32 %s17, %s24
      %p26 = scmp.eq.s32.totalorder %s25, 0
      %s28 = sadd.s32 %s27, 1
      %s29 = scalar_select %p26, %s27, %s28
      %p32 = pneg %p26
      %p33 = scmp.eq.s32.totalorder %s17, 1
      %p34 = por %p32, %p33
      %p35 = scmp.ne.s32.totalorder %s27, %s30
      %p36 = scmp.eq.s32.totalorder %s17, 0
      %p37 = por %p35, %p36
      %p38 = scmp.ne.s32.totalorder %s27, %s30
      %p39 = scmp.eq.s32.totalorder %s22, 1
      %p40 = por %p38, %p39
      %p41 = scmp.ne.s32.totalorder %s30, %s31
      %p42 = scmp.eq.s32.totalorder %s22, 0
      %p43 = por %p41, %p42
      %p44 = scmp.ne.s32.totalorder %s30, %s31
      %p45 = scmp.eq.s32.totalorder %s23, 1
      %p46 = por %p44, %p45
      %p48 = scmp.ne.s32.totalorder %s31, %s47
      %p49 = scmp.eq.s32.totalorder %s23, 0
      %p50 = por %p48, %p49
      %s52 = sadd.s32 %s51, 1
      %p55 = scmp.eq.s32.totalorder %s17, 1
      %p56 = scmp.ne.s32.totalorder %s51, %s53
      %p57 = scmp.eq.s32.totalorder %s17, 0
      %p58 = por %p56, %p57
      %p59 = scmp.ne.s32.totalorder %s51, %s53
      %p60 = scmp.eq.s32.totalorder %s22, 1
      %p61 = por %p59, %p60
      %p62 = scmp.ne.s32.totalorder %s53, %s54
      %p63 = scmp.eq.s32.totalorder %s22, 0
      %p64 = por %p62, %p63
      %p65 = scmp.ne.s32.totalorder %s53, %s54
      %p66 = scmp.eq.s32.totalorder %s23, 1
      %p67 = por %p65, %p66
      %p69 = scmp.ne.s32.totalorder %s54, %s68
      %p70 = scmp.eq.s32.totalorder %s23, 0
      %p71 = por %p69, %p70
      %s73 = sadd.s32 %s72, 1
      %p76 = scmp.eq.s32.totalorder %s17, 1
      %p77 = scmp.ne.s32.totalorder %s72, %s74
      %p78 = scmp.eq.s32.totalorder %s17, 0
      %p79 = por %p77, %p78
      %p80 = scmp.ne.s32.totalorder %s72, %s74
      %p81 = scmp.eq.s32.totalorder %s22, 1
      %p82 = por %p80, %p81
      %p83 = scmp.ne.s32.totalorder %s74, %s75
      %p84 = scmp.eq.s32.totalorder %s22, 0
      %p85 = por %p83, %p84
      %p86 = scmp.ne.s32.totalorder %s74, %s75
      %p87 = scmp.eq.s32.totalorder %s23, 1
      %p88 = por %p86, %p87
      %p90 = scmp.ne.s32.totalorder %s75, %s89
      %p91 = scmp.eq.s32.totalorder %s23, 0
      %p92 = por %p90, %p91
      %s94 = sadd.s32 %s93, 1
      %p97 = scmp.eq.s32.totalorder %s17, 1
      %p98 = scmp.ne.s32.totalorder %s93, %s95
      %p99 = scmp.eq.s32.totalorder %s17, 0
      %p100 = por %p98, %p99
      %p101 = scmp.ne.s32.totalorder %s93, %s95
      %p102 = scmp.eq.s32.totalorder %s22, 1
      %p103 = por %p101, %p102
      %p104 = scmp.ne.s32.totalorder %s95, %s96
      %p105 = scmp.eq.s32.totalorder %s22, 0
      %p106 = por %p104, %p105
      %p107 = scmp.ne.s32.totalorder %s95, %s96
      %p108 = scmp.eq.s32.totalorder %s23, 1
      %p109 = por %p107, %p108
      %p111 = scmp.ne.s32.totalorder %s96, %s110
      %p112 = scmp.eq.s32.totalorder %s23, 0
      %p113 = por %p111, %p112
      %s115 = sadd.s32 %s114, 1
      %p118 = scmp.eq.s32.totalorder %s17, 1
      %p119 = scmp.ne.s32.totalorder %s114, %s116
      %p120 = scmp.eq.s32.totalorder %s17, 0
      %p121 = por %p119, %p120
      %p122 = scmp.ne.s32.totalorder %s114, %s116
      %p123 = scmp.eq.s32.totalorder %s22, 1
      %p124 = por %p122, %p123
      %p125 = scmp.ne.s32.totalorder %s116, %s117
      %p126 = scmp.eq.s32.totalorder %s22, 0
      %p127 = por %p125, %p126
      %p128 = scmp.ne.s32.totalorder %s116, %s117
      %p129 = scmp.eq.s32.totalorder %s23, 1
      %p130 = por %p128, %p129
      %p132 = scmp.ne.s32.totalorder %s117, %s131
      %p133 = scmp.eq.s32.totalorder %s23, 0
      %p134 = por %p132, %p133
      %s136 = sadd.s32 %s135, 1
      %p139 = scmp.eq.s32.totalorder %s17, 1
      %p140 = scmp.ne.s32.totalorder %s135, %s137
      %p141 = scmp.eq.s32.totalorder %s17, 0
      %p142 = por %p140, %p141
      %p143 = scmp.ne.s32.totalorder %s135, %s137
      %p144 = scmp.eq.s32.totalorder %s22, 1
      %p145 = por %p143, %p144
      %p146 = scmp.ne.s32.totalorder %s137, %s138
      %p147 = scmp.eq.s32.totalorder %s22, 0
      %p148 = por %p146, %p147
      %p149 = scmp.ne.s32.totalorder %s137, %s138
      %p150 = scmp.eq.s32.totalorder %s23, 1
      %p151 = por %p149, %p150
      %p153 = scmp.ne.s32.totalorder %s138, %s152
      %p154 = scmp.eq.s32.totalorder %s23, 0
      %p155 = por %p153, %p154
      %s157 = sadd.s32 %s156, 1
      %p160 = scmp.eq.s32.totalorder %s17, 1
      %p161 = scmp.ne.s32.totalorder %s156, %s158
      %p162 = scmp.eq.s32.totalorder %s17, 0
      %p163 = por %p161, %p162
      %p164 = scmp.ne.s32.totalorder %s156, %s158
      %p165 = scmp.eq.s32.totalorder %s22, 1
      %p166 = por %p164, %p165
      %p167 = scmp.ne.s32.totalorder %s158, %s159
      %p168 = scmp.eq.s32.totalorder %s22, 0
      %p169 = por %p167, %p168
      %p170 = scmp.ne.s32.totalorder %s158, %s159
      %p171 = scmp.eq.s32.totalorder %s23, 1
      %p172 = por %p170, %p171
      %p174 = scmp.ne.s32.totalorder %s159, %s173
      %p175 = scmp.eq.s32.totalorder %s23, 0
      %p176 = por %p174, %p175
      %s177 = ssub.s32 %s17, %s24
      %p178 = scmp.eq.s32.totalorder %s177, 0
      %s180 = sadd.s32 %s179, 1
      %s181 = scalar_select %p178, %s179, %s180
      %p184 = pneg %p178
      %p185 = scmp.eq.s32.totalorder %s17, 1
      %p186 = por %p184, %p185
      %p187 = scmp.ne.s32.totalorder %s179, %s182
      %p188 = scmp.eq.s32.totalorder %s17, 0
      %p189 = por %p187, %p188
      %p190 = scmp.ne.s32.totalorder %s179, %s182
      %p191 = scmp.eq.s32.totalorder %s22, 1
      %p192 = por %p190, %p191
      %p193 = scmp.ne.s32.totalorder %s182, %s183
      %p194 = scmp.eq.s32.totalorder %s22, 0
      %p195 = por %p193, %p194
      %p196 = scmp.ne.s32.totalorder %s182, %s183
      %p197 = scmp.eq.s32.totalorder %s23, 1
      %p198 = por %p196, %p197
      %p200 = scmp.ne.s32.totalorder %s183, %s199
      %p201 = scmp.eq.s32.totalorder %s23, 0
      %p202 = por %p200, %p201
      %p203 = scmp.le.s32.totalorder 1, %s17
      %p204 = scmp.lt.s32.totalorder %s17, 3
      %p205 = pnand %p203, %p204
      %p206 = pneg %p205
      // Predicated region
      $region9: #{tpu_custom_call.1} parent=5 // pred_check
        _
      $region10: #{tpu_custom_call.1} parent=5 // pred_check_branch
        %208 = sbr.rel (%p205) target = $region12
      $region11: #{tpu_custom_call.1} parent=5 // pred_region
        %s209 = ssub.s32 %s17, 1
        // Predicated region
        $region13: #{tpu_custom_call.1} parent=11 // pred_check
          %p210 = pneg %p64
        $region14: #{tpu_custom_call.1} parent=11 // pred_check_branch
          %212 = sbr.rel (%p210) target = $region16
        $region15: #{tpu_custom_call.1} parent=11 // pred_region
          %s214 = ssub.s32 8192, 8192
          %215 = vsyncadd [#allocation5], %s214
          %s216 = sshll.u32 [#allocation4], 4
          %s217 = int_to_ptr.vmem [resolvable:$true] %s216
          %222 = dma.hbm_to_vmem [thread:$0]  %s1, 8192, %s217, [#allocation5], 256, 256, 16
        $region16: #{tpu_custom_call.1} parent=11 // pred_fallthru
          _
        // Predicated region
        $region17: #{tpu_custom_call.1} parent=11 // pred_check
          %p223 = pneg %p85
        $region18: #{tpu_custom_call.1} parent=11 // pred_check_branch
          %225 = sbr.rel (%p223) target = $region20
        $region19: #{tpu_custom_call.1} parent=11 // pred_region
          _
        $region20: #{tpu_custom_call.1} parent=11 // pred_fallthru
          _
        // Predicated region
        $region21: #{tpu_custom_call.1} parent=11 // pred_check
          %p226 = pneg %p106
        $region22: #{tpu_custom_call.1} parent=11 // pred_check_branch
          %228 = sbr.rel (%p226) target = $region24
        $region23: #{tpu_custom_call.1} parent=11 // pred_region
          %s230 = ssub.s32 2048, 2048
          %231 = vsyncadd [#allocation5], %s230
          %s232 = sshll.u32 [#allocation6], 4
          %s233 = int_to_ptr.vmem [resolvable:$true] %s232
          %238 = dma.hbm_to_vmem [thread:$0]  %s3, 2048, %s233, [#allocation5], 128, 128, 8
        $region24: #{tpu_custom_call.1} parent=11 // pred_fallthru
          _
        // Predicated region
        $region25: #{tpu_custom_call.1} parent=11 // pred_check
          %p239 = pneg %p127
        $region26: #{tpu_custom_call.1} parent=11 // pred_check_branch
          %241 = sbr.rel (%p239) target = $region28
        $region27: #{tpu_custom_call.1} parent=11 // pred_region
          _
        $region28: #{tpu_custom_call.1} parent=11 // pred_fallthru
          _
        // Predicated region
        $region29: #{tpu_custom_call.1} parent=11 // pred_check
          %p242 = pneg %p148
        $region30: #{tpu_custom_call.1} parent=11 // pred_check_branch
          %244 = sbr.rel (%p242) target = $region32
        $region31: #{tpu_custom_call.1} parent=11 // pred_region
          _
        $region32: #{tpu_custom_call.1} parent=11 // pred_fallthru
          _
        // Predicated region
        $region33: #{tpu_custom_call.1} parent=11 // pred_check
          %p245 = pneg %p169
        $region34: #{tpu_custom_call.1} parent=11 // pred_check_branch
          %247 = sbr.rel (%p245) target = $region36
        $region35: #{tpu_custom_call.1} parent=11 // pred_region
          _
        $region36: #{tpu_custom_call.1} parent=11 // pred_fallthru
          _
      $region12: #{tpu_custom_call.1} parent=5 // pred_fallthru
        _
      %p248 = scmp.lt.s32.totalorder %s17, 2
      // Predicated region
      $region37: #{tpu_custom_call.1} parent=5 // pred_check
        %p249 = pneg %p248
      $region38: #{tpu_custom_call.1} parent=5 // pred_check_branch
        %251 = sbr.rel (%p249) target = $region40
      $region39: #{tpu_custom_call.1} parent=5 // pred_region
        // Predicated region
        $region41: #{tpu_custom_call.1} parent=39 // pred_check
          %p252 = pneg %p37
        $region42: #{tpu_custom_call.1} parent=39 // pred_check_branch
          %254 = sbr.rel (%p252) target = $region44
        $region43: #{tpu_custom_call.1} parent=39 // pred_region
          %s255 = sand.u32 %s27, 1
          %s256 = scalar_lea.sflag [#allocation3], %s255
          %s257 = sand.u32 %s27, 1
          %s258 = smul.addr %s257, 32
          %s259 = scalar_lea.vmem [#allocation2], %s258
          %s260 = smul.u32 2, %s17
          %s261 = ssub.s32 3, %s260
          %p262 = scmp.lt.s32.totalorder %s261, 2
          %s263 = scalar_select %p262, %s261, 2
          %s264 = smul.u32 128, %s263
          %s265 = smul.u32 %s264, 2
          %s267 = ssub.s32 512, %s265
          %268 = vsyncadd %s256, %s267
          %p269 = scmp.ne.s32.totalorder 0, %s265
          %s270 = smul.addr %s260, 2
          %s271 = smul.addr %s270, 128
          %s272 = scalar_lea.hbm %s0, %s271
          %s273 = smul.u32 16, %s263
          %s274 = sshll.u32 %s259, 4
          %s275 = int_to_ptr.vmem [resolvable:$true] %s274
          %s276 = sshll.u32 %s273, 4
          %280 = dma.hbm_to_vmem [thread:$0]  (%p269), %s272, %s276, %s275, %s256, 256, 256, 16
        $region44: #{tpu_custom_call.1} parent=39 // pred_fallthru
          _
      $region40: #{tpu_custom_call.1} parent=5 // pred_fallthru
        _
      %p281 = scmp.le.s32.totalorder 1, %s17
      %p282 = scmp.lt.s32.totalorder %s17, 3
      %p283 = pnand %p281, %p282
      %p284 = pneg %p283
      // Predicated region
      $region45: #{tpu_custom_call.1} parent=5 // pred_check
        _
      $region46: #{tpu_custom_call.1} parent=5 // pred_check_branch
        %286 = sbr.rel (%p283) target = $region48
      $region47: #{tpu_custom_call.1} parent=5 // pred_region
        %s287 = ssub.s32 %s17, 1
        %s288 = sand.u32 %s30, 1
        %s289 = scalar_lea.sflag [#allocation3], %s288
        %s290 = sand.u32 %s30, 1
        %s291 = smul.addr %s290, 32
        %s292 = scalar_lea.vmem [#allocation2], %s291
        // Predicated region
        $region49: #{tpu_custom_call.1} parent=47 // pred_check
          %p293 = pneg %p43
        $region50: #{tpu_custom_call.1} parent=47 // pred_check_branch
          %295 = sbr.rel (%p293) target = $region52
        $region51: #{tpu_custom_call.1} parent=47 // pred_region
          %296 = dma.done %s289, 512
        $region52: #{tpu_custom_call.1} parent=47 // pred_fallthru
          _
        // Predicated region
        $region53: #{tpu_custom_call.1} parent=47 // pred_check
          %p297 = pneg %p64
        $region54: #{tpu_custom_call.1} parent=47 // pred_check_branch
          %299 = sbr.rel (%p297) target = $region56
        $region55: #{tpu_custom_call.1} parent=47 // pred_region
          %300 = dma.done [#allocation5], 8192
        $region56: #{tpu_custom_call.1} parent=47 // pred_fallthru
          _
        // Predicated region
        $region57: #{tpu_custom_call.1} parent=47 // pred_check
          %p301 = pneg %p106
        $region58: #{tpu_custom_call.1} parent=47 // pred_check_branch
          %303 = sbr.rel (%p301) target = $region60
        $region59: #{tpu_custom_call.1} parent=47 // pred_region
          %304 = dma.done [#allocation5], 2048
        $region60: #{tpu_custom_call.1} parent=47 // pred_fallthru
          _
        %s305 = sand.u32 %s30, 1
        %s306 = scalar_lea.sflag [#allocation3], %s305
        %s307 = sand.u32 %s30, 1
        %s308 = smul.addr %s307, 32
        %s309 = scalar_lea.vmem [#allocation2], %s308
        %p310 = pneg %p43
        %p311 = pneg %p40
        %p312 = pneg %p64
        %p313 = pneg %p61
        %p314 = pneg %p85
        %p315 = pneg %p82
        %p316 = pneg %p106
        %p317 = pneg %p103
        %p318 = pneg %p127
        %p319 = pneg %p124
        %p320 = pneg %p148
        %p321 = pneg %p145
        %p322 = pneg %p169
        %p323 = pneg %p166
        %p324 = pneg %p195
        %p325 = pneg %p192
        %s326 = sand.u32 %s182, 1
        %s327 = sand.u32 %s182, 1
        %s328 = smul.addr %s327, 16
        %s329 = scalar_lea.vmem [#allocation7], %s328
        %s330 = smul.u32 2, %s22
        %s331 = ssub.s32 3, %s330
        %p332 = scmp.lt.s32.totalorder %s331, 2
        %s333 = scalar_select %p332, %s331, 2
        %s334 = smul.u32 128, %s333
        %s335 = smul.u32 %s334, 2
        %s336 = smul.u32 2, %s22
        %s337 = ssub.s32 3, %s336
        %p338 = scmp.lt.s32.totalorder %s337, 2
        %s339 = scalar_select %p338, %s337, 2
        %s340 = smul.u32 128, %s339
        %v341 = vld [vmem:[%s292] sm:$0xff]
        %v342 = vld [vmem:[%s292 + $0x8] sm:$0xff]
        %v343 = vld [vmem:[%s292 + $0x10] sm:$0xff]
        %v344 = vld [vmem:[%s292 + $0x18] sm:$0xff]
        %v345 = vld [vmem:[#allocation4] sm:$0xff]
        %v346 = vld [vmem:[#allocation4 + $0x8] sm:$0xff]
        %v347 = vld [vmem:[#allocation4 + $0x10] sm:$0xff]
        %v348 = vld [vmem:[#allocation4 + $0x18] sm:$0xff]
        %v349 = vld [vmem:[#allocation4 + $0x20] sm:$0xff]
        %v350 = vld [vmem:[#allocation4 + $0x28] sm:$0xff]
        %v351 = vld [vmem:[#allocation4 + $0x30] sm:$0xff]
        %v352 = vld [vmem:[#allocation4 + $0x38] sm:$0xff]
        %v353 = vld [vmem:[#allocation4 + $0x40] sm:$0xff]
        %v354 = vld [vmem:[#allocation4 + $0x48] sm:$0xff]
        %v355 = vld [vmem:[#allocation4 + $0x50] sm:$0xff]
        %v356 = vld [vmem:[#allocation4 + $0x58] sm:$0xff]
        %v357 = vld [vmem:[#allocation4 + $0x60] sm:$0xff]
        %v358 = vld [vmem:[#allocation4 + $0x68] sm:$0xff]
        %v359 = vld [vmem:[#allocation4 + $0x70] sm:$0xff]
        %v360 = vld [vmem:[#allocation4 + $0x78] sm:$0xff]
        %v361 = vld [vmem:[#allocation4 + $0x80] sm:$0xff]
        %v362 = vld [vmem:[#allocation4 + $0x88] sm:$0xff]
        %v363 = vld [vmem:[#allocation4 + $0x90] sm:$0xff]
        %v364 = vld [vmem:[#allocation4 + $0x98] sm:$0xff]
        %v365 = vld [vmem:[#allocation4 + $0xa0] sm:$0xff]
        %v366 = vld [vmem:[#allocation4 + $0xa8] sm:$0xff]
        %v367 = vld [vmem:[#allocation4 + $0xb0] sm:$0xff]
        %v368 = vld [vmem:[#allocation4 + $0xb8] sm:$0xff]
        %v369 = vld [vmem:[#allocation4 + $0xc0] sm:$0xff]
        %v370 = vld [vmem:[#allocation4 + $0xc8] sm:$0xff]
        %v371 = vld [vmem:[#allocation4 + $0xd0] sm:$0xff]
        %v372 = vld [vmem:[#allocation4 + $0xd8] sm:$0xff]
        %v373 = vld [vmem:[#allocation4 + $0xe0] sm:$0xff]
        %v374 = vld [vmem:[#allocation4 + $0xe8] sm:$0xff]
        %v375 = vld [vmem:[#allocation4 + $0xf0] sm:$0xff]
        %v376 = vld [vmem:[#allocation4 + $0xf8] sm:$0xff]
        %v377 = vld [vmem:[#allocation4 + $0x100] sm:$0xff]
        %v378 = vld [vmem:[#allocation4 + $0x108] sm:$0xff]
        %v379 = vld [vmem:[#allocation4 + $0x110] sm:$0xff]
        %v380 = vld [vmem:[#allocation4 + $0x118] sm:$0xff]
        %v381 = vld [vmem:[#allocation4 + $0x120] sm:$0xff]
        %v382 = vld [vmem:[#allocation4 + $0x128] sm:$0xff]
        %v383 = vld [vmem:[#allocation4 + $0x130] sm:$0xff]
        %v384 = vld [vmem:[#allocation4 + $0x138] sm:$0xff]
        %v385 = vld [vmem:[#allocation4 + $0x140] sm:$0xff]
        %v386 = vld [vmem:[#allocation4 + $0x148] sm:$0xff]
        %v387 = vld [vmem:[#allocation4 + $0x150] sm:$0xff]
        %v388 = vld [vmem:[#allocation4 + $0x158] sm:$0xff]
        %v389 = vld [vmem:[#allocation4 + $0x160] sm:$0xff]
        %v390 = vld [vmem:[#allocation4 + $0x168] sm:$0xff]
        %v391 = vld [vmem:[#allocation4 + $0x170] sm:$0xff]
        %v392 = vld [vmem:[#allocation4 + $0x178] sm:$0xff]
        %v393 = vld [vmem:[#allocation4 + $0x180] sm:$0xff]
        %v394 = vld [vmem:[#allocation4 + $0x188] sm:$0xff]
        %v395 = vld [vmem:[#allocation4 + $0x190] sm:$0xff]
        %v396 = vld [vmem:[#allocation4 + $0x198] sm:$0xff]
        %v397 = vld [vmem:[#allocation4 + $0x1a0] sm:$0xff]
        %v398 = vld [vmem:[#allocation4 + $0x1a8] sm:$0xff]
        %v399 = vld [vmem:[#allocation4 + $0x1b0] sm:$0xff]
        %v400 = vld [vmem:[#allocation4 + $0x1b8] sm:$0xff]
        %v401 = vld [vmem:[#allocation4 + $0x1c0] sm:$0xff]
        %v402 = vld [vmem:[#allocation4 + $0x1c8] sm:$0xff]
        %v403 = vld [vmem:[#allocation4 + $0x1d0] sm:$0xff]
        %v404 = vld [vmem:[#allocation4 + $0x1d8] sm:$0xff]
        %v405 = vld [vmem:[#allocation4 + $0x1e0] sm:$0xff]
        %v406 = vld [vmem:[#allocation4 + $0x1e8] sm:$0xff]
        %v407 = vld [vmem:[#allocation4 + $0x1f0] sm:$0xff]
        %v408 = vld [vmem:[#allocation4 + $0x1f8] sm:$0xff]
        %v409 = vld [vmem:[%s2] sm:$0x3]
        %v411 = vlaneseq
        %v412 = vshrl.u32 %v411, 7
        %v413 = vsub.s32 0, %v412
        %v414 = vrot.slane %v409, %v413
        %v415 = vlaneseq
        %v416 = vshrl.u32 %v415, 7
        %v417 = vsub.s32 1, %v416
        %v418 = vrot.slane %v409, %v417
        %421 = vmatprep.subr.mxu0 %v346
        %422 = vmatpush1.msra.mxu0 %v345
        %423 = vmatprep.subr.mxu0 %v348
        %424 = vmatpush1.msra.mxu0 %v347
        %425 = vmatprep.subr.mxu0 %v350
        %426 = vmatpush1.msra.mxu0 %v349
        %427 = vmatprep.subr.mxu0 %v352
        %428 = vmatpush1.msra.mxu0 %v351
        %429 = vmatprep.subr.mxu0 %v354
        %430 = vmatpush1.msra.mxu0 %v353
        %431 = vmatprep.subr.mxu0 %v356
        %432 = vmatpush1.msra.mxu0 %v355
        %433 = vmatprep.subr.mxu0 %v358
        %434 = vmatpush1.msra.mxu0 %v357
        %435 = vmatprep.subr.mxu0 %v360
        %436 = vmatpush1.msra.mxu0 %v359
        %437 = vmatprep.subr.mxu0 %v362
        %438 = vmatpush1.msra.mxu0 %v361
        %439 = vmatprep.subr.mxu0 %v364
        %440 = vmatpush1.msra.mxu0 %v363
        %441 = vmatprep.subr.mxu0 %v366
        %442 = vmatpush1.msra.mxu0 %v365
        %443 = vmatprep.subr.mxu0 %v368
        %444 = vmatpush1.msra.mxu0 %v367
        %445 = vmatprep.subr.mxu0 %v370
        %446 = vmatpush1.msra.mxu0 %v369
        %447 = vmatprep.subr.mxu0 %v372
        %448 = vmatpush1.msra.mxu0 %v371
        %449 = vmatprep.subr.mxu0 %v374
        %450 = vmatpush1.msra.mxu0 %v373
        %451 = vmatprep.subr.mxu0 %v376
        %452 = vmatpush1.msra.mxu0 %v375
        %453 = vmatprep.subr.mxu0 %v378
        %454 = vmatpush1.msra.mxu0 %v377
        %455 = vmatprep.subr.mxu0 %v380
        %456 = vmatpush1.msra.mxu0 %v379
        %457 = vmatprep.subr.mxu0 %v382
        %458 = vmatpush1.msra.mxu0 %v381
        %459 = vmatprep.subr.mxu0 %v384
        %460 = vmatpush1.msra.mxu0 %v383
        %461 = vmatprep.subr.mxu0 %v386
        %462 = vmatpush1.msra.mxu0 %v385
        %463 = vmatprep.subr.mxu0 %v388
        %464 = vmatpush1.msra.mxu0 %v387
        %465 = vmatprep.subr.mxu0 %v390
        %466 = vmatpush1.msra.mxu0 %v389
        %467 = vmatprep.subr.mxu0 %v392
        %468 = vmatpush1.msra.mxu0 %v391
        %469 = vmatprep.subr.mxu0 %v394
        %470 = vmatpush1.msra.mxu0 %v393
        %471 = vmatprep.subr.mxu0 %v396
        %472 = vmatpush1.msra.mxu0 %v395
        %473 = vmatprep.subr.mxu0 %v398
        %474 = vmatpush1.msra.mxu0 %v397
        %475 = vmatprep.subr.mxu0 %v400
        %476 = vmatpush1.msra.mxu0 %v399
        %477 = vmatprep.subr.mxu0 %v402
        %478 = vmatpush1.msra.mxu0 %v401
        %479 = vmatprep.subr.mxu0 %v404
        %480 = vmatpush1.msra.mxu0 %v403
        %481 = vmatprep.subr.mxu0 %v406
        %482 = vmatpush1.msra.mxu0 %v405
        %483 = vmatprep.subr.mxu0 %v408
        %484 = vmatpush1.msra.mxu0 %v407
        %485 = vmatprep.mubr.f32.mxu0 %v342
        %486 = vmatmul.mubr.f32.gmra.mrb[0].mxu0 %v341
        %v487 = vpop.f32.mrb[0].mxu0
        %v488 = vadd.f32 %v414, %v487
        %v489 = vpop.f32.mrb[0].mxu0
        %v490 = vadd.f32 %v418, %v489
        %491 = vmatprep.mubr.f32.mxu0 %v344
        %492 = vmatmul.mubr.f32.gmra.mrb[0].mxu0 %v343
        %v493 = vpop.f32.mrb[0].mxu0
        %v494 = vadd.f32 %v414, %v493
        %v495 = vpop.f32.mrb[0].mxu0
        %v496 = vadd.f32 %v418, %v495
        %497 = vdwg.mxu0
        %v498 = vmax.f32 %v488, 0.0
        %v499 = vmax.f32 %v490, 0.0
        %v500 = vmax.f32 %v494, 0.0
        %v501 = vmax.f32 %v496, 0.0
        %v502 = vld [vmem:[#allocation6] sm:$0xff]
        %v503 = vld [vmem:[#allocation6 + $0x8] sm:$0xff]
        %v504 = vld [vmem:[#allocation6 + $0x10] sm:$0xff]
        %v505 = vld [vmem:[#allocation6 + $0x18] sm:$0xff]
        %v506 = vld [vmem:[#allocation6 + $0x20] sm:$0xff]
        %v507 = vld [vmem:[#allocation6 + $0x28] sm:$0xff]
        %v508 = vld [vmem:[#allocation6 + $0x30] sm:$0xff]
        %v509 = vld [vmem:[#allocation6 + $0x38] sm:$0xff]
        %v510 = vld [vmem:[#allocation6 + $0x40] sm:$0xff]
        %v511 = vld [vmem:[#allocation6 + $0x48] sm:$0xff]
        %v512 = vld [vmem:[#allocation6 + $0x50] sm:$0xff]
        %v513 = vld [vmem:[#allocation6 + $0x58] sm:$0xff]
        %v514 = vld [vmem:[#allocation6 + $0x60] sm:$0xff]
        %v515 = vld [vmem:[#allocation6 + $0x68] sm:$0xff]
        %v516 = vld [vmem:[#allocation6 + $0x70] sm:$0xff]
        %v517 = vld [vmem:[#allocation6 + $0x78] sm:$0xff]
        %v518 = vld [vmem:[%s4] sm:$0x1]
        %v520 = vlaneseq
        %v521 = vshrl.u32 %v520, 7
        %v522 = vsub.s32 0, %v521
        %v523 = vrot.slane %v518, %v522
        %525 = vmatprep.subr.mxu0 0.0
        %526 = vmatpush1.msra.mxu0 %v502
        %527 = vmatprep.subr.mxu0 0.0
        %528 = vmatpush1.msra.mxu0 %v503
        %529 = vmatprep.subr.mxu0 0.0
        %530 = vmatpush1.msra.mxu0 %v504
        %531 = vmatprep.subr.mxu0 0.0
        %532 = vmatpush1.msra.mxu0 %v505
        %533 = vmatprep.subr.mxu0 0.0
        %534 = vmatpush1.msra.mxu0 %v506
        %535 = vmatprep.subr.mxu0 0.0
        %536 = vmatpush1.msra.mxu0 %v507
        %537 = vmatprep.subr.mxu0 0.0
        %538 = vmatpush1.msra.mxu0 %v508
        %539 = vmatprep.subr.mxu0 0.0
        %540 = vmatpush1.msra.mxu0 %v509
        %541 = vmatprep.subr.mxu0 0.0
        %542 = vmatpush1.msra.mxu0 %v510
        %543 = vmatprep.subr.mxu0 0.0
        %544 = vmatpush1.msra.mxu0 %v511
        %545 = vmatprep.subr.mxu0 0.0
        %546 = vmatpush1.msra.mxu0 %v512
        %547 = vmatprep.subr.mxu0 0.0
        %548 = vmatpush1.msra.mxu0 %v513
        %549 = vmatprep.subr.mxu0 0.0
        %550 = vmatpush1.msra.mxu0 %v514
        %551 = vmatprep.subr.mxu0 0.0
        %552 = vmatpush1.msra.mxu0 %v515
        %553 = vmatprep.subr.mxu0 0.0
        %554 = vmatpush1.msra.mxu0 %v516
        %555 = vmatprep.subr.mxu0 0.0
        %556 = vmatpush1.msra.mxu0 %v517
        %557 = vmatprep.subr.mxu0 0.0
        %558 = vmatpush1.msra.mxu0 0.0
        %559 = vmatprep.subr.mxu0 0.0
        %560 = vmatpush1.msra.mxu0 0.0
        %561 = vmatprep.subr.mxu0 0.0
        %562 = vmatpush1.msra.mxu0 0.0
        %563 = vmatprep.subr.mxu0 0.0
        %564 = vmatpush1.msra.mxu0 0.0
        %565 = vmatprep.subr.mxu0 0.0
        %566 = vmatpush1.msra.mxu0 0.0
        %567 = vmatprep.subr.mxu0 0.0
        %568 = vmatpush1.msra.mxu0 0.0
        %569 = vmatprep.subr.mxu0 0.0
        %570 = vmatpush1.msra.mxu0 0.0
        %571 = vmatprep.subr.mxu0 0.0
        %572 = vmatpush1.msra.mxu0 0.0
        %573 = vmatprep.subr.mxu0 0.0
        %574 = vmatpush1.msra.mxu0 0.0
        %575 = vmatprep.subr.mxu0 0.0
        %576 = vmatpush1.msra.mxu0 0.0
        %577 = vmatprep.subr.mxu0 0.0
        %578 = vmatpush1.msra.mxu0 0.0
        %579 = vmatprep.subr.mxu0 0.0
        %580 = vmatpush1.msra.mxu0 0.0
        %581 = vmatprep.subr.mxu0 0.0
        %582 = vmatpush1.msra.mxu0 0.0
        %583 = vmatprep.subr.mxu0 0.0
        %584 = vmatpush1.msra.mxu0 0.0
        %585 = vmatprep.subr.mxu0 0.0
        %586 = vmatpush1.msra.mxu0 0.0
        %587 = vmatprep.subr.mxu0 0.0
        %588 = vmatpush1.msra.mxu0 0.0
        %589 = vmatprep.mubr.f32.mxu0 0.0
        %590 = vmatmul.mubr.f32.gmra.mrb[0].mxu0 %v498
        %v591 = vpop.f32.mrb[0].mxu0
        %v592 = vadd.f32 %v523, %v591
        %v593 = vpop.f32.mrb[0].mxu0
        %594 = vmatprep.mubr.f32.mxu0 0.0
        %595 = vmatmul.mubr.f32.gmra.mrb[0].mxu0 %v500
        %v596 = vpop.f32.mrb[0].mxu0
        %v597 = vadd.f32 %v523, %v596
        %v598 = vpop.f32.mrb[0].mxu0
        %599 = vdwg.mxu0
        %v600 = vmax.f32 %v592, 0.0
        %v601 = vmax.f32 %v597, 0.0
        %v602 = vld [vmem:[%s5] sm:$0x1]
        %v603 = vlaneseq
        %v604 = vshrl.u32 %v603, 7
        %v605 = vsub.s32 0, %v604
        %v606 = vrot.slane %v602, %v605
        %v607 = vmul.f32 %v600, %v606
        %v608 = vmul.f32 %v601, %v606
        %609 = vadd.xlane.f32.xlu0 %v607
        %v610 = vpop.xlane.xlu0 %609
        %611 = vadd.xlane.f32.xlu0 %v608
        %v612 = vpop.xlane.xlu0 %611
        %v613 = vld [vmem:[%s6] sm:$0x1]
        %v614 = vlaneseq
        %v615 = vshrl.u32 %v614, 7
        %v616 = vsub.s32 0, %v615
        %v617 = vrot.slane %v613, %v616
        %v618 = vadd.f32 %v610, %v617
        %v619 = vadd.f32 %v612, %v617
        %v620 = vld [vmem:[%s5 + $0x1] sm:$0x1]
        %v621 = vlaneseq
        %v622 = vshrl.u32 %v621, 7
        %v623 = vsub.s32 0, %v622
        %v624 = vrot.slane %v620, %v623
        %v625 = vmul.f32 %v499, %v624
        %v626 = vmul.f32 %v501, %v624
        %627 = vadd.xlane.f32.xlu0 %v625
        %v628 = vpop.xlane.xlu0 %627
        %629 = vadd.xlane.f32.xlu0 %v626
        %v630 = vpop.xlane.xlu0 %629
        %v631 = vld [vmem:[%s6 + $0x1] sm:$0x1]
        %v632 = vlaneseq
        %v633 = vshrl.u32 %v632, 7
        %v634 = vsub.s32 0, %v633
        %v635 = vrot.slane %v631, %v634
        %v636 = vadd.f32 %v628, %v635
        %v637 = vadd.f32 %v630, %v635
        %vm638 = vcmp.gt.f32.partialorder %v636, 20.0
        %vm639 = vcmp.gt.f32.partialorder %v637, 20.0
        %v640 = vmin.f32 %v636, 20.0
        %v641 = vmin.f32 %v637, 20.0
        %v642 = vmul.f32 %v640, 1.442695
        %v643 = vpow.pop %v642
        %v644 = vmul.f32 %v641, 1.442695
        %v645 = vpow.pop %v644
        %v646 = vadd.f32 %v643, 1.0
        %v647 = vlog2.pop %v646
        %v648 = vmul.f32 %v647, 0.6931472
        %v649 = vmul.f32 -0.5, %v643
        %v650 = vadd.f32 %v649, 1.0
        %v651 = vmul.f32 %v650, %v643
        %v652 = vand.u32 2147483647, %v643
        %vm653 = vcmp.lt.f32.partialorder %v652, 0.0004427343
        %v654 = vsel %vm653, %v651, %v648
        %v655 = vadd.f32 %v645, 1.0
        %v656 = vlog2.pop %v655
        %v657 = vmul.f32 %v656, 0.6931472
        %v658 = vmul.f32 -0.5, %v645
        %v659 = vadd.f32 %v658, 1.0
        %v660 = vmul.f32 %v659, %v645
        %v661 = vand.u32 2147483647, %v645
        %vm662 = vcmp.lt.f32.partialorder %v661, 0.0004427343
        %v663 = vsel %vm662, %v660, %v657
        %v664 = vsel %vm638, %v636, %v654
        %v665 = vsel %vm639, %v637, %v663
        %668 = vrot.lane.b32.xlu0 %v664, 1
        %v669 = vpop.permute.xlu0 %668
        %670 = vrot.lane.b32.xlu0 %v665, 1
        %v671 = vpop.permute.xlu0 %670
        %vm674 = vcmask 7168
        %v675 = vsel %vm674, %v618, %v669
        %v676 = vsel %vm674, %v619, %v671
        %vm677 = vcmask 15360
        %678 = vst.msk [vmem:[%s329] sm:$0xff] %vm677, %v675
        %679 = vst.msk [vmem:[%s329 + $0x8] sm:$0xff] %vm677, %v676
        %s680 = sand.u32 %s182, 1
        %s681 = sand.u32 %s182, 1
        %s682 = smul.addr %s681, 16
        %s683 = scalar_lea.vmem [#allocation7], %s682
        // Predicated region
        $region61: #{tpu_custom_call.1} parent=47 // pred_check
          %p684 = pneg %p192
        $region62: #{tpu_custom_call.1} parent=47 // pred_check_branch
          %686 = sbr.rel (%p684) target = $region64
        $region63: #{tpu_custom_call.1} parent=47 // pred_region
          %s687 = smul.u32 2, %s22
          %s688 = ssub.s32 3, %s687
          %p689 = scmp.lt.s32.totalorder %s688, 2
          %s690 = scalar_select %p689, %s688, 2
          %s691 = smul.u32 128, %s690
          %p692 = scmp.ne.s32.totalorder 0, %s691
          %s693 = smul.addr %s687, 8
          %s694 = scalar_lea.vmem %s7, %s693
          // Predicated region
          $region65: #{tpu_custom_call.1} parent=63 // pred_check
            %p695 = pneg %p692
          $region66: #{tpu_custom_call.1} parent=63 // pred_check_branch
            %697 = sbr.rel (%p695) target = $region68
          $region67: #{tpu_custom_call.1} parent=63 // pred_region
            // Predicated region
            $region69: #{tpu_custom_call.1} parent=67 // pred_check
              _
            $region70: #{tpu_custom_call.1} parent=67 // pred_check_branch
              %699 = sbr.rel (0) target = $region72
            $region71: #{tpu_custom_call.1} parent=67 // pred_region
              // Predicated region
              $region91: #{tpu_custom_call.1} parent=71 // pred_check
                _
              $region92: #{tpu_custom_call.1} parent=71 // pred_check_branch
                %750 = sbr.rel (0) target = $region94
              $region93: #{tpu_custom_call.1} parent=71 // pred_region
                %s751 = sshrl.u32 %s690, 1
                // While loop
                $region95: #{tpu_custom_call.1} parent=93 // loop_pre_header
                  _
                $region96: #{tpu_custom_call.1} parent=93 // loop_header
                  %s753 = sphi 0, %s755
                  %p754 = scmp.ge.s32.totalorder %s753, %s751
                  %s758 = sphi 0, %s767
                  %s759 = sphi %s683, %s770
                  %s760 = sphi %s694, %s771
                $region97: #{tpu_custom_call.1} parent=93 // loop_header_branch
                  %757 = sbr.rel (%p754) target = $region101
                $region98: #{tpu_custom_call.1} parent=93 // loop_body
                  %v761 = vld [vmem:[%s759] sm:$0xff]
                  %762 = vst [vmem:[%s760] sm:$0xff] %v761
                  %v763 = vld [vmem:[%s759 + $0x8] sm:$0xff]
                  %764 = vst [vmem:[%s760 + $0x8] sm:$0xff] %v763
                  %s765 = sadd.s32 1, %s758
                  %p766 = scmp.ge.s32.totalorder %s765, %s751
                  %s767 = scalar_select %p766, 0, %s765
                  %s768 = smul.u32 %s767, 16
                  %s769 = smul.u32 %s767, 16
                  %s770 = scalar_lea.vmem %s683, %s768 [#allocation7]
                  %s771 = scalar_lea.vmem %s694, %s769
                $region99: #{tpu_custom_call.1} parent=93 // loop_footer
                  %s755 = sadd.s32 %s753, 1
                $region100: #{tpu_custom_call.1} parent=93 // loop_footer_branch
                  %752 = sbr.rel target = $region96
                $region101: #{tpu_custom_call.1} parent=93 // loop_exit
                  _
                %s772 = sshrl.u32 %s690, 1
                %s773 = sand.u32 %s690, 1
                %s774 = smul.u32 %s772, 2
                %s775 = smul.u32 8, %s774
                %s776 = scalar_lea.vmem %s683, %s775 [#allocation7]
                %s777 = smul.u32 8, %s774
                %s778 = scalar_lea.vmem %s694, %s777
                // While loop
                $region102: #{tpu_custom_call.1} parent=93 // loop_pre_header
                  _
                $region103: #{tpu_custom_call.1} parent=93 // loop_header
                  %s780 = sphi 0, %s782
                  %p781 = scmp.ge.s32.totalorder %s780, %s773
                  %s785 = sphi 0, %s792
                  %s786 = sphi %s776, %s795
                  %s787 = sphi %s778, %s796
                $region104: #{tpu_custom_call.1} parent=93 // loop_header_branch
                  %784 = sbr.rel (%p781) target = $region108
                $region105: #{tpu_custom_call.1} parent=93 // loop_body
                  %v788 = vld [vmem:[%s786] sm:$0xff]
                  %789 = vst [vmem:[%s787] sm:$0xff] %v788
                  %s790 = sadd.s32 1, %s785
                  %p791 = scmp.ge.s32.totalorder %s790, %s773
                  %s792 = scalar_select %p791, 0, %s790
                  %s793 = smul.u32 %s792, 8
                  %s794 = smul.u32 %s792, 8
                  %s795 = scalar_lea.vmem %s776, %s793 [#allocation7]
                  %s796 = scalar_lea.vmem %s778, %s794
                $region106: #{tpu_custom_call.1} parent=93 // loop_footer
                  %s782 = sadd.s32 %s780, 1
                $region107: #{tpu_custom_call.1} parent=93 // loop_footer_branch
                  %779 = sbr.rel target = $region103
                $region108: #{tpu_custom_call.1} parent=93 // loop_exit
                  _
              $region94: #{tpu_custom_call.1} parent=71 // pred_fallthru
                _
              // Predicated region
              $region109: #{tpu_custom_call.1} parent=71 // pred_check
                _
              $region110: #{tpu_custom_call.1} parent=71 // pred_check_branch
                %798 = sbr.rel target = $region112
              $region111: #{tpu_custom_call.1} parent=71 // pred_region
                _
              $region112: #{tpu_custom_call.1} parent=71 // pred_fallthru
                _
            $region72: #{tpu_custom_call.1} parent=67 // pred_fallthru
              _
            // Predicated region
            $region73: #{tpu_custom_call.1} parent=67 // pred_check
              _
            $region74: #{tpu_custom_call.1} parent=67 // pred_check_branch
              %701 = sbr.rel target = $region76
            $region75: #{tpu_custom_call.1} parent=67 // pred_region
              %s703 = sshrl.u32 %s690, 1
              // While loop
              $region77: #{tpu_custom_call.1} parent=75 // loop_pre_header
                _
              $region78: #{tpu_custom_call.1} parent=75 // loop_header
                %s705 = sphi 0, %s707
                %p706 = scmp.ge.s32.totalorder %s705, %s703
                %s710 = sphi 0, %s719
                %s711 = sphi %s683, %s722
                %s712 = sphi %s694, %s723
              $region79: #{tpu_custom_call.1} parent=75 // loop_header_branch
                %709 = sbr.rel (%p706) target = $region83
              $region80: #{tpu_custom_call.1} parent=75 // loop_body
                %v713 = vld [vmem:[%s711] sm:$0xff]
                %714 = vst [vmem:[%s712] sm:$0xff] %v713
                %v715 = vld [vmem:[%s711 + $0x8] sm:$0xff]
                %716 = vst [vmem:[%s712 + $0x8] sm:$0xff] %v715
                %s717 = sadd.s32 1, %s710
                %p718 = scmp.ge.s32.totalorder %s717, %s703
                %s719 = scalar_select %p718, 0, %s717
                %s720 = smul.u32 %s719, 16
                %s721 = smul.u32 %s719, 16
                %s722 = scalar_lea.vmem %s683, %s720 [#allocation7]
                %s723 = scalar_lea.vmem %s694, %s721
              $region81: #{tpu_custom_call.1} parent=75 // loop_footer
                %s707 = sadd.s32 %s705, 1
              $region82: #{tpu_custom_call.1} parent=75 // loop_footer_branch
                %704 = sbr.rel target = $region78
              $region83: #{tpu_custom_call.1} parent=75 // loop_exit
                _
              %s724 = sshrl.u32 %s690, 1
              %s725 = sand.u32 %s690, 1
              %s726 = smul.u32 %s724, 2
              %s727 = smul.u32 8, %s726
              %s728 = scalar_lea.vmem %s683, %s727 [#allocation7]
              %s729 = smul.u32 8, %s726
              %s730 = scalar_lea.vmem %s694, %s729
              // While loop
              $region84: #{tpu_custom_call.1} parent=75 // loop_pre_header
                _
              $region85: #{tpu_custom_call.1} parent=75 // loop_header
                %s732 = sphi 0, %s734
                %p733 = scmp.ge.s32.totalorder %s732, %s725
                %s737 = sphi 0, %s744
                %s738 = sphi %s728, %s747
                %s739 = sphi %s730, %s748
              $region86: #{tpu_custom_call.1} parent=75 // loop_header_branch
                %736 = sbr.rel (%p733) target = $region90
              $region87: #{tpu_custom_call.1} parent=75 // loop_body
                %v740 = vld [vmem:[%s738] sm:$0xff]
                %741 = vst [vmem:[%s739] sm:$0xff] %v740
                %s742 = sadd.s32 1, %s737
                %p743 = scmp.ge.s32.totalorder %s742, %s725
                %s744 = scalar_select %p743, 0, %s742
                %s745 = smul.u32 %s744, 8
                %s746 = smul.u32 %s744, 8
                %s747 = scalar_lea.vmem %s728, %s745 [#allocation7]
                %s748 = scalar_lea.vmem %s730, %s746
              $region88: #{tpu_custom_call.1} parent=75 // loop_footer
                %s734 = sadd.s32 %s732, 1
              $region89: #{tpu_custom_call.1} parent=75 // loop_footer_branch
                %731 = sbr.rel target = $region85
              $region90: #{tpu_custom_call.1} parent=75 // loop_exit
                _
            $region76: #{tpu_custom_call.1} parent=67 // pred_fallthru
              _
          $region68: #{tpu_custom_call.1} parent=63 // pred_fallthru
            _
          %799 = vnop
        $region64: #{tpu_custom_call.1} parent=47 // pred_fallthru
          _
      $region48: #{tpu_custom_call.1} parent=5 // pred_fallthru
        _
      %p800 = scmp.le.s32.totalorder 2, %s17
      // Predicated region
      $region113: #{tpu_custom_call.1} parent=5 // pred_check
        %p801 = pneg %p800
      $region114: #{tpu_custom_call.1} parent=5 // pred_check_branch
        %803 = sbr.rel (%p801) target = $region116
      $region115: #{tpu_custom_call.1} parent=5 // pred_region
        %s804 = ssub.s32 %s17, 2
        // Predicated region
        $region117: #{tpu_custom_call.1} parent=115 // pred_check
          %p805 = pneg %p198
        $region118: #{tpu_custom_call.1} parent=115 // pred_check_branch
          %807 = sbr.rel (%p805) target = $region120
        $region119: #{tpu_custom_call.1} parent=115 // pred_region
          %s808 = sand.u32 %s183, 1
          %s809 = sand.u32 %s183, 1
          %s810 = smul.addr %s809, 16
          %s811 = scalar_lea.vmem [#allocation7], %s810
        $region120: #{tpu_custom_call.1} parent=115 // pred_fallthru
          _
      $region116: #{tpu_custom_call.1} parent=5 // pred_fallthru
        _
    $region6: #{tpu_custom_call.1} parent=1 // loop_footer
      %s21 = sadd.s32 1, %s17
    $region7: #{tpu_custom_call.1} parent=1 // loop_footer_branch
      %16 = sbr.rel target = $region3
    $region8: #{tpu_custom_call.1} parent=1 // loop_exit
      _
    %812 = vsyncpa [#allocation3], 1
    %s813 = scalar_lea.sflag [#allocation3], 1
    %814 = vsyncpa %s813, 1
    %815 = vsyncpa [#allocation5], 1

</llo_original>
